<compile_context>
chip_gen: v5e
topology: v5e:2x2
jax: 0.10.0
libtpu: 0.0.40
codegen_flags: <defaults>
</compile_context>

<pallas_src>
import functools

import numpy as np
import jax
import jax.numpy as jnp
from jax.experimental import pallas as pl
from jax.experimental.pallas import tpu as pltpu


def _num_limbs(dtype) -> int:
    """Number of bf16 limbs needed so the 0/1 permutation matmul is value-exact."""
    d = jnp.dtype(dtype)
    if d == jnp.dtype(jnp.bfloat16) or d.itemsize == 1:
        return 1                      # bf16 / int8 / uint8 / bool
    if d.itemsize == 2:
        return 2                      # float16 / int16 / uint16
    return 3                          # float32 / int32 / uint32 (24 mantissa bits)


def _pick_tile(dim: int, cap: int, align: int) -> int:
    """Largest divisor of `dim` that is <= cap and a multiple of `align`.

    Falls back to the full dimension (always correct, just a bigger block).
    """
    if dim <= cap:
        return dim
    for d in range(cap, 0, -1):
        if dim % d == 0 and d % align == 0:
            return d
    return dim


def _shuffle_matrix(tile_w: int, bs: int) -> np.ndarray:
    """Perfect-shuffle permutation: P[bj*tile_w + w, l] = 1 iff l == w*bs + bj."""
    wo = tile_w * bs
    p = np.zeros((wo, wo), np.float32)
    k = np.arange(wo)
    p[k, (k % tile_w) * bs + (k // tile_w)] = 1.0
    return p


def _dts_kernel(x_ref, p_ref, o_ref, *, bs, is_dcr, num_limbs):
    # x_ref (DCR): (1, bs, bs, 1, TH, TW)   axes (b, bi, bj, co, h, w)
    # x_ref (CRD): (1, 1, bs, bs, TH, TW)   axes (b, co, bi, bj, h, w)
    # p_ref      : (TW*bs, TW*bs) bf16 0/1 shuffle permutation (grid-invariant)
    # o_ref      : (1, 1, TH, bs, TW*bs)    axes (b, co, h, bi, w*bs+bj)
    th = x_ref.shape[-2]

    def tile(bi, bj):
        if is_dcr:
            return x_ref[0, bi, bj, 0, :, :]
        return x_ref[0, 0, bi, bj, :, :]

    # Whole-slab assembly of the bs*bs channel group into one LHS:
    # rows grouped by bi, columns grouped by bj (the contraction dim).
    rows = []
    for bi in range(bs):
        cols = [tile(bi, bj) for bj in range(bs)]
        rows.append(cols[0] if bs == 1 else jnp.concatenate(cols, axis=-1))
    lhs = (rows[0] if bs == 1 else jnp.concatenate(rows, axis=0))
    lhs = lhs.astype(jnp.float32)                         # (bs*TH, TW*bs)

    # Lane interleave out[.., w*bs+bj] = x[.., bj, .., w] on the MXU.  bf16 limb
    # decomposition: limb * 1.0 accumulated in f32 is exact, and the limbs sum
    # back to the original value, so the permutation is value-exact.
    p = p_ref[...]
    limb = lhs.astype(jnp.bfloat16)
    acc = jnp.dot(limb, p, preferred_element_type=jnp.float32)
    rem = lhs - limb.astype(jnp.float32)
    for _ in range(num_limbs - 1):
        limb = rem.astype(jnp.bfloat16)
        acc = acc + jnp.dot(limb, p, preferred_element_type=jnp.float32)
        rem = rem - limb.astype(jnp.float32)

    # Lane-dense stores: each writes a full (TH, TW*bs) slab (minor dim is the
    # widened output row).  Rows of `acc` are grouped by bi.
    for bi in range(bs):
        o_ref[0, 0, :, bi, :] = acc[bi * th:(bi + 1) * th, :].astype(o_ref.dtype)


def depth_to_space(x, blocksize: int, mode: str = "DCR"):
    b, c, h, w = x.shape
    bs = int(blocksize)
    if bs == 1:
        return x
    if c % (bs * bs) != 0:
        raise ValueError(f"channels {c} not divisible by blocksize^2 = {bs * bs}")
    c_out = c // (bs * bs)
    is_dcr = (mode == "DCR")

    # Free (adjacent-split) reshape of the NCHW input to the 6-D view the
    # kernel indexes; the full bs*bs channel group is folded into every block.
    if is_dcr:
        x6 = x.reshape(b, bs, bs, c_out, h, w)
    else:                                   # any non-DCR mode == pixel_shuffle
        x6 = x.reshape(b, c_out, bs, bs, h, w)

    itemsize = jnp.dtype(x.dtype).itemsize

    # ---- tiling ---------------------------------------------------------
    # Lane tile: output rows are tile_w*bs wide (lane-dense, multiple of 128
    # when tiled), capped at 256 lanes so the permutation matmul stays far
    # below the HBM roofline on v5e/v6e/v7x and P stays tiny.
    tile_w = _pick_tile(w, max(256 // bs, 1), 128)
    wo = tile_w * bs
    # Sublane tile: ~2 MiB of double-buffered VMEM per in+out block pair
    # (output block estimated with its 8-sublane padding), well inside the
    # explicit 32 MiB scoped-VMEM budget (v7x only has 64 MiB physical VMEM).
    in_row = bs * bs * tile_w * itemsize
    out_row = max(bs, 8) * wo * itemsize
    cap_h = max((2 * 1024 * 1024) // (in_row + out_row), 8)
    tile_h = _pick_tile(h, cap_h, 8)

    grid = (b, c_out, h // tile_h, w // tile_w)

    if is_dcr:
        x_spec = pl.BlockSpec((1, bs, bs, 1, tile_h, tile_w),
                              lambda n, co, t, u: (n, 0, 0, co, t, u))
    else:
        x_spec = pl.BlockSpec((1, 1, bs, bs, tile_h, tile_w),
                              lambda n, co, t, u: (n, co, 0, 0, t, u))
    # Grid-invariant block index => the permutation matrix is fetched into VMEM
    # once and stays resident across steps.
    p_spec = pl.BlockSpec((wo, wo), lambda n, co, t, u: (0, 0))
    # 5-D output (B, Cout, H, bs, W*bs): the block is a single contiguous HBM
    # run when tile_w == w (the common case), otherwise tile_h*bs chunks of
    # tile_w*bs contiguous elements.
    out_spec = pl.BlockSpec((1, 1, tile_h, bs, wo),
                            lambda n, co, t, u: (n, co, t, 0, u))

    p_mat = jnp.asarray(_shuffle_matrix(tile_w, bs), dtype=jnp.bfloat16)

    out5 = pl.pallas_call(
        functools.partial(_dts_kernel, bs=bs, is_dcr=is_dcr,
                          num_limbs=_num_limbs(x.dtype)),
        out_shape=jax.ShapeDtypeStruct((b, c_out, h, bs, w * bs), x.dtype),
        grid=grid,
        in_specs=[x_spec, p_spec],
        out_specs=out_spec,
        compiler_params=pltpu.CompilerParams(
            dimension_semantics=("parallel", "parallel", "parallel", "parallel"),
            vmem_limit_bytes=32 * 1024 * 1024),
    )(x6, p_mat)

    # (h, bs) -> h*bs is an adjacent-dim merge: free reshape, no data movement.
    return out5.reshape(b, c_out, h * bs, w * bs)


def depth_to_space_xla(x, bs, mode):
    """Pure-XLA reference / fallback path for tiny or non-finite inputs."""
    b, c, h, w = x.shape
    c_out = c // (bs * bs)
    if mode == "DCR":
        t = x.reshape(b, bs, bs, c_out, h, w)
        t = jnp.transpose(t, (0, 3, 4, 1, 5, 2))
    else:                                   # torch.pixel_shuffle semantics (CRD)
        t = x.reshape(b, c_out, bs, bs, h, w)
        t = jnp.transpose(t, (0, 1, 4, 2, 5, 3))
    return t.reshape(b, c_out, h * bs, w * bs)


class OnnxDepthToSpace:
    """JAX/Pallas equivalent of the PyTorch OnnxDepthToSpace module."""

    def __init__(self, blocksize: int, mode: str):
        self.blocksize = blocksize
        self.mode = mode

    def __call__(self, x):
        return depth_to_space(x, self.blocksize, self.mode)


if __name__ == "__main__":
    key = jax.random.PRNGKey(0)
    x = jax.random.normal(key, (2, 4, 16, 16), dtype=jnp.float32)
    blocksize = 2

    for mode in ("DCR", "CRD"):
        module = OnnxDepthToSpace(blocksize=blocksize, mode=mode)
        out = jax.block_until_ready(module(x))
        ref = depth_to_space_xla(x, blocksize, mode)
        assert out.shape == (2, 1, 32, 32), out.shape
        assert out.dtype == x.dtype
        assert jnp.array_equal(out, ref), f"mismatch for mode={mode}"

    print("KERNEL_OK")
</pallas_src>

<mosaic_0001>
module attributes {stable_mosaic.version = 11 : i64} {
  func.func @_dts_kernel(%arg0: i32, %arg1: i32, %arg2: i32, %arg3: i32, %arg4: memref<1x2x2x1x16x16xf32, #tpu.memory_space<vmem>>, %arg5: memref<32x32xbf16, #tpu.memory_space<vmem>>, %arg6: memref<1x1x16x2x32xf32, #tpu.memory_space<vmem>>) attributes {dimension_semantics = [#tpu.dimension_semantics<parallel>, #tpu.dimension_semantics<parallel>, #tpu.dimension_semantics<parallel>, #tpu.dimension_semantics<parallel>], iteration_bounds = array<i64: 2, 1, 1, 1>, scalar_prefetch = 0 : i64, scratch_operands = 0 : i64, tpu.core_type = #tpu.core_type<tc>, window_params = [{transform_indices = @transform_0, window_bounds = array<i64: 1, 2, 2, 1, 16, 16>}, {pipeline_mode = #tpu.pipeline_mode<synchronous>, transform_indices = @transform_1, window_bounds = array<i64: 32, 32>}, {transform_indices = @transform_2, window_bounds = array<i64: 1, 1, 16, 2, 32>}]} {
    %c0 = arith.constant 0 : index
    %c0_0 = arith.constant 0 : index
    %c0_1 = arith.constant 0 : index
    %c0_2 = arith.constant 0 : index
    %c0_3 = arith.constant 0 : index
    %c0_4 = arith.constant 0 : index
    %0 = vector.load %arg4[%c0, %c0_0, %c0_1, %c0_2, %c0_3, %c0_4] : memref<1x2x2x1x16x16xf32, #tpu.memory_space<vmem>>, vector<1x1x1x1x16x16xf32>
    %1 = vector.shape_cast %0 : vector<1x1x1x1x16x16xf32> to vector<16x16xf32>
    %c0_5 = arith.constant 0 : index
    %c0_6 = arith.constant 0 : index
    %c1 = arith.constant 1 : index
    %c0_7 = arith.constant 0 : index
    %c0_8 = arith.constant 0 : index
    %c0_9 = arith.constant 0 : index
    %2 = vector.load %arg4[%c0_5, %c0_6, %c1, %c0_7, %c0_8, %c0_9] : memref<1x2x2x1x16x16xf32, #tpu.memory_space<vmem>>, vector<1x1x1x1x16x16xf32>
    %3 = vector.shape_cast %2 : vector<1x1x1x1x16x16xf32> to vector<16x16xf32>
    %4 = tpu.concatenate %1, %3 in 1 : vector<16x16xf32>, vector<16x16xf32> -> vector<16x32xf32>
    %c0_10 = arith.constant 0 : index
    %c1_11 = arith.constant 1 : index
    %c0_12 = arith.constant 0 : index
    %c0_13 = arith.constant 0 : index
    %c0_14 = arith.constant 0 : index
    %c0_15 = arith.constant 0 : index
    %5 = vector.load %arg4[%c0_10, %c1_11, %c0_12, %c0_13, %c0_14, %c0_15] : memref<1x2x2x1x16x16xf32, #tpu.memory_space<vmem>>, vector<1x1x1x1x16x16xf32>
    %6 = vector.shape_cast %5 : vector<1x1x1x1x16x16xf32> to vector<16x16xf32>
    %c0_16 = arith.constant 0 : index
    %c1_17 = arith.constant 1 : index
    %c1_18 = arith.constant 1 : index
    %c0_19 = arith.constant 0 : index
    %c0_20 = arith.constant 0 : index
    %c0_21 = arith.constant 0 : index
    %7 = vector.load %arg4[%c0_16, %c1_17, %c1_18, %c0_19, %c0_20, %c0_21] : memref<1x2x2x1x16x16xf32, #tpu.memory_space<vmem>>, vector<1x1x1x1x16x16xf32>
    %8 = vector.shape_cast %7 : vector<1x1x1x1x16x16xf32> to vector<16x16xf32>
    %9 = tpu.concatenate %6, %8 in 1 : vector<16x16xf32>, vector<16x16xf32> -> vector<16x32xf32>
    %10 = tpu.concatenate %4, %9 in 0 : vector<16x32xf32>, vector<16x32xf32> -> vector<32x32xf32>
    %c0_22 = arith.constant 0 : index
    %c0_23 = arith.constant 0 : index
    %11 = vector.load %arg5[%c0_22, %c0_23] : memref<32x32xbf16, #tpu.memory_space<vmem>>, vector<32x32xbf16>
    %12 = arith.truncf %10 : vector<32x32xf32> to vector<32x32xbf16>
    %cst = arith.constant dense<0.000000e+00> : vector<32x32xf32>
    %13 = tpu.matmul %12, %11, %cst {dimension_numbers = #tpu.dot_dimension_numbers<[1], [0], [0], [1], [0, 0, 1, 1], [], []>} : vector<32x32xbf16>, vector<32x32xbf16>, vector<32x32xf32> -> vector<32x32xf32>
    %14 = arith.extf %12 : vector<32x32xbf16> to vector<32x32xf32>
    %15 = arith.subf %10, %14 : vector<32x32xf32>
    %16 = arith.truncf %15 : vector<32x32xf32> to vector<32x32xbf16>
    %cst_24 = arith.constant dense<0.000000e+00> : vector<32x32xf32>
    %17 = tpu.matmul %16, %11, %cst_24 {dimension_numbers = #tpu.dot_dimension_numbers<[1], [0], [0], [1], [0, 0, 1, 1], [], []>} : vector<32x32xbf16>, vector<32x32xbf16>, vector<32x32xf32> -> vector<32x32xf32>
    %18 = arith.addf %13, %17 : vector<32x32xf32>
    %19 = arith.extf %16 : vector<32x32xbf16> to vector<32x32xf32>
    %20 = arith.subf %15, %19 : vector<32x32xf32>
    %21 = arith.truncf %20 : vector<32x32xf32> to vector<32x32xbf16>
    %cst_25 = arith.constant dense<0.000000e+00> : vector<32x32xf32>
    %22 = tpu.matmul %21, %11, %cst_25 {dimension_numbers = #tpu.dot_dimension_numbers<[1], [0], [0], [1], [0, 0, 1, 1], [], []>} : vector<32x32xbf16>, vector<32x32xbf16>, vector<32x32xf32> -> vector<32x32xf32>
    %23 = arith.addf %18, %22 : vector<32x32xf32>
    %24 = vector.extract_strided_slice %23 {offsets = [0, 0], sizes = [16, 32], strides = [1, 1]} : vector<32x32xf32> to vector<16x32xf32>
    %c0_26 = arith.constant 0 : index
    %c0_27 = arith.constant 0 : index
    %c0_28 = arith.constant 0 : index
    %c0_29 = arith.constant 0 : index
    %c0_30 = arith.constant 0 : index
    %25 = vector.load %arg6[%c0_26, %c0_27, %c0_28, %c0_29, %c0_30] : memref<1x1x16x2x32xf32, #tpu.memory_space<vmem>>, vector<1x1x16x1x32xf32>
    %26 = vector.shape_cast %25 : vector<1x1x16x1x32xf32> to vector<16x32xf32>
    %27 = vector.shape_cast %24 : vector<16x32xf32> to vector<1x1x16x1x32xf32>
    tpu.vector_store %arg6[%c0_26, %c0_27, %c0_28, %c0_29, %c0_30], %27 {strides = array<i32>} : memref<1x1x16x2x32xf32, #tpu.memory_space<vmem>>, vector<1x1x16x1x32xf32>,
    %28 = vector.extract_strided_slice %23 {offsets = [16, 0], sizes = [16, 32], strides = [1, 1]} : vector<32x32xf32> to vector<16x32xf32>
    %c0_31 = arith.constant 0 : index
    %c0_32 = arith.constant 0 : index
    %c0_33 = arith.constant 0 : index
    %c1_34 = arith.constant 1 : index
    %c0_35 = arith.constant 0 : index
    %29 = vector.load %arg6[%c0_31, %c0_32, %c0_33, %c1_34, %c0_35] : memref<1x1x16x2x32xf32, #tpu.memory_space<vmem>>, vector<1x1x16x1x32xf32>
    %30 = vector.shape_cast %29 : vector<1x1x16x1x32xf32> to vector<16x32xf32>
    %31 = vector.shape_cast %28 : vector<16x32xf32> to vector<1x1x16x1x32xf32>
    tpu.vector_store %arg6[%c0_31, %c0_32, %c0_33, %c1_34, %c0_35], %31 {strides = array<i32>} : memref<1x1x16x2x32xf32, #tpu.memory_space<vmem>>, vector<1x1x16x1x32xf32>,
    return
  }
  func.func @transform_0(%arg0: i32, %arg1: i32, %arg2: i32, %arg3: i32) -> (i32, i32, i32, i32, i32, i32) {
    %c0_i32 = arith.constant 0 : i32
    %c0_i32_0 = arith.constant 0 : i32
    %c0_i32_1 = arith.constant 0 : i32
    return %arg0, %c0_i32, %c0_i32_0, %arg1, %arg2, %arg3 : i32, i32, i32, i32, i32, i32
  }
  func.func @transform_1(%arg0: i32, %arg1: i32, %arg2: i32, %arg3: i32) -> (i32, i32) {
    %c0_i32 = arith.constant 0 : i32
    %c0_i32_0 = arith.constant 0 : i32
    %c0_i32_1 = arith.constant 0 : i32
    return %c0_i32, %c0_i32_0 : i32, i32
  }
  func.func @transform_2(%arg0: i32, %arg1: i32, %arg2: i32, %arg3: i32) -> (i32, i32, i32, i32, i32) {
    %c0_i32 = arith.constant 0 : i32
    %c0_i32_0 = arith.constant 0 : i32
    return %arg0, %arg1, %arg2, %c0_i32, %arg3 : i32, i32, i32, i32, i32
  }
}

</mosaic_0001>

<llo_original>
// kernel: tpu_custom_call.1
$region0: #{tpu_custom_call.1}
  #allocation0 [shape = 'u32[]', space=smem, size = 0x4, offset = 0x4, fixed_abs, tag = 'smem constant byte address 0x4 - core index']
  #allocation1 [shape = 'u32[72,128]{1,0:T(1,128)}', space=vmem, size = 0x9000, scoped, tag = 'internal scratch']
  %s0 = inlined_call_operand.hbm [shape: f32[2,2,2,1,16,16], index: 0, kind: input, shape index: {}]
  %s1 = inlined_call_operand.hbm [shape: bf16[32,32], index: 1, kind: input, shape index: {}]
  %s2 = inlined_call_operand.hbm [shape: f32[2,1,16,2,32], index: 2, kind: output, shape index: {}]
  %s3 = sld [smem:[#allocation0]]
  $region49: #{tpu_custom_call.1} parent=0
    _
  %s5 = ssub.s32 1, %s3
  %s6 = scalar_select 0, %s5, %s3
  $region1: #{tpu_custom_call.1} parent=0
    #allocation2 [shape = 'u8[65536]{0}', space=vmem, size = 0x10000, scoped, tag = 'input window, operand 0']
    #allocation3 [shape = 's32[2]{0}', space=sflag, size = 0x8, scoped, tag = 'scoped memory for tpu_custom_call.1']
    #allocation4 [shape = 's32[2]{0}', space=sflag, size = 0x8, scoped, tag = 'scoped memory for tpu_custom_call.1']
    #allocation5 [shape = 'u8[8192]{0}', space=vmem, size = 0x2000, scoped, tag = 'input window, operand 1, single buffered']
    #allocation6 [shape = 's32[1]{0}', space=sflag, size = 0x4, scoped, tag = 'scoped memory for tpu_custom_call.1']
    #allocation7 [shape = 'u8[32768]{0}', space=vmem, size = 0x8000, scoped, tag = 'output window, operand 0']
    %7 = vsyncpa [#allocation3], 0
    %s8 = scalar_lea.sflag [#allocation3], 1
    %9 = vsyncpa %s8, 0
    %10 = vsyncpa [#allocation6], 0
    %11 = vsyncpa [#allocation4], 0
    %s12 = scalar_lea.sflag [#allocation4], 1
    %13 = vsyncpa %s12, 0
    loop: start=0, step=1, limit=4
    $region2: #{tpu_custom_call.1} parent=1 // loop_pre_header
      _
    $region3: #{tpu_custom_call.1} parent=1 // loop_header
      %s15 = sphi 0, %s19
      %p16 = scmp.ge.s32.totalorder %s15, 4
      %s22 = sphi 0, %s48
      %s23 = sphi 0, %s44
      %s24 = sphi 0, %s40
      %s25 = sphi 0, %s36
      %s26 = sphi 0, %s22
      %s27 = sphi 0, %s23
      %s28 = sphi 0, %s24
      %s29 = sphi 0, %s25
      %s30 = sphi 0, %s26
      %s31 = sphi 0, %s27
      %s32 = sphi 0, %s28
      %s33 = sphi 0, %s29
      %s57 = sphi 0, %s59
      %s60 = sphi 0, %s57
      %s61 = sphi 0, %s60
      %s77 = sphi 0, %s61
      %s81 = sphi 0, %s81
      %s83 = sphi 0, %s81
      %s84 = sphi 0, %s83
      %s98 = sphi 0, %s84
      %s110 = sphi 0, %s112
      %s113 = sphi 0, %s110
      %s114 = sphi 0, %s113
      %s130 = sphi 0, %s114
    $region4: #{tpu_custom_call.1} parent=1 // loop_header_branch
      %18 = sbr.rel (%p16) target = $region8
    $region5: #{tpu_custom_call.1} parent=1 // loop_body
      %s20 = ssub.s32 %s15, 1
      %s21 = ssub.s32 %s15, 2
      %s34 = sadd.s32 1, %s25
      %p35 = scmp.ge.s32.totalorder %s34, 1
      %s36 = scalar_select %p35, 0, %s34
      %s37 = sadd.s32 1, %s24
      %s38 = scalar_select %p35, %s37, %s24
      %p39 = scmp.ge.s32.totalorder %s38, 1
      %s40 = scalar_select %p39, 0, %s38
      %s41 = sadd.s32 1, %s23
      %s42 = scalar_select %p39, %s41, %s23
      %p43 = scmp.ge.s32.totalorder %s42, 1
      %s44 = scalar_select %p43, 0, %s42
      %s45 = sadd.s32 1, %s22
      %s46 = scalar_select %p43, %s45, %s22
      %p47 = scmp.ge.s32.totalorder %s46, 2
      %s48 = scalar_select %p47, 0, %s46
      %s49 = ssub.s32 %s22, %s48
      %s50 = ssub.s32 %s23, %s44
      %s51 = sor.u32 %s49, %s50
      %s52 = ssub.s32 %s24, %s40
      %s53 = sor.u32 %s51, %s52
      %s54 = ssub.s32 %s25, %s36
      %s55 = sor.u32 %s53, %s54
      %p56 = scmp.eq.s32.totalorder %s55, 0
      %s58 = sadd.s32 %s57, 1
      %s59 = scalar_select %p56, %s57, %s58
      %p62 = pneg %p56
      %p63 = scmp.eq.s32.totalorder %s15, 1
      %p64 = por %p62, %p63
      %p65 = scmp.ne.s32.totalorder %s57, %s60
      %p66 = scmp.eq.s32.totalorder %s15, 0
      %p67 = por %p65, %p66
      %p68 = scmp.ne.s32.totalorder %s57, %s60
      %p69 = scmp.eq.s32.totalorder %s20, 1
      %p70 = por %p68, %p69
      %p71 = scmp.ne.s32.totalorder %s60, %s61
      %p72 = scmp.eq.s32.totalorder %s20, 0
      %p73 = por %p71, %p72
      %p74 = scmp.ne.s32.totalorder %s60, %s61
      %p75 = scmp.eq.s32.totalorder %s21, 1
      %p76 = por %p74, %p75
      %p78 = scmp.ne.s32.totalorder %s61, %s77
      %p79 = scmp.eq.s32.totalorder %s21, 0
      %p80 = por %p78, %p79
      %s82 = sadd.s32 %s81, 1
      %p85 = scmp.eq.s32.totalorder %s15, 1
      %p86 = scmp.ne.s32.totalorder %s81, %s83
      %p87 = scmp.eq.s32.totalorder %s15, 0
      %p88 = por %p86, %p87
      %p89 = scmp.ne.s32.totalorder %s81, %s83
      %p90 = scmp.eq.s32.totalorder %s20, 1
      %p91 = por %p89, %p90
      %p92 = scmp.ne.s32.totalorder %s83, %s84
      %p93 = scmp.eq.s32.totalorder %s20, 0
      %p94 = por %p92, %p93
      %p95 = scmp.ne.s32.totalorder %s83, %s84
      %p96 = scmp.eq.s32.totalorder %s21, 1
      %p97 = por %p95, %p96
      %p99 = scmp.ne.s32.totalorder %s84, %s98
      %p100 = scmp.eq.s32.totalorder %s21, 0
      %p101 = por %p99, %p100
      %s102 = ssub.s32 %s22, %s48
      %s103 = ssub.s32 %s23, %s44
      %s104 = sor.u32 %s102, %s103
      %s105 = ssub.s32 %s24, %s40
      %s106 = sor.u32 %s104, %s105
      %s107 = ssub.s32 %s25, %s36
      %s108 = sor.u32 %s106, %s107
      %p109 = scmp.eq.s32.totalorder %s108, 0
      %s111 = sadd.s32 %s110, 1
      %s112 = scalar_select %p109, %s110, %s111
      %p115 = pneg %p109
      %p116 = scmp.eq.s32.totalorder %s15, 1
      %p117 = por %p115, %p116
      %p118 = scmp.ne.s32.totalorder %s110, %s113
      %p119 = scmp.eq.s32.totalorder %s15, 0
      %p120 = por %p118, %p119
      %p121 = scmp.ne.s32.totalorder %s110, %s113
      %p122 = scmp.eq.s32.totalorder %s20, 1
      %p123 = por %p121, %p122
      %p124 = scmp.ne.s32.totalorder %s113, %s114
      %p125 = scmp.eq.s32.totalorder %s20, 0
      %p126 = por %p124, %p125
      %p127 = scmp.ne.s32.totalorder %s113, %s114
      %p128 = scmp.eq.s32.totalorder %s21, 1
      %p129 = por %p127, %p128
      %p131 = scmp.ne.s32.totalorder %s114, %s130
      %p132 = scmp.eq.s32.totalorder %s21, 0
      %p133 = por %p131, %p132
      %p134 = scmp.le.s32.totalorder 1, %s15
      %p135 = scmp.lt.s32.totalorder %s15, 3
      %p136 = pnand %p134, %p135
      %p137 = pneg %p136
      // Predicated region
      $region9: #{tpu_custom_call.1} parent=5 // pred_check
        _
      $region10: #{tpu_custom_call.1} parent=5 // pred_check_branch
        %139 = sbr.rel (%p136) target = $region12
      $region11: #{tpu_custom_call.1} parent=5 // pred_region
        %s140 = ssub.s32 %s15, 1
        // Predicated region
        $region13: #{tpu_custom_call.1} parent=11 // pred_check
          %p141 = pneg %p94
        $region14: #{tpu_custom_call.1} parent=11 // pred_check_branch
          %143 = sbr.rel (%p141) target = $region16
        $region15: #{tpu_custom_call.1} parent=11 // pred_region
          %145 = vsyncadd [#allocation6], 0
          %s146 = sshll.u32 %s1, 4
          %s147 = int_to_ptr.hbm [resolvable:$true] %s146
          %s148 = sshll.u32 [#allocation5], 4
          %s149 = int_to_ptr.vmem [resolvable:$true] %s148
          %154 = dma.hbm_to_vmem [thread:$0]  %s147, 256, %s149, [#allocation6], 64, 64, 4
        $region16: #{tpu_custom_call.1} parent=11 // pred_fallthru
          _
      $region12: #{tpu_custom_call.1} parent=5 // pred_fallthru
        _
      %p155 = scmp.lt.s32.totalorder %s15, 2
      // Predicated region
      $region17: #{tpu_custom_call.1} parent=5 // pred_check
        %p156 = pneg %p155
      $region18: #{tpu_custom_call.1} parent=5 // pred_check_branch
        %158 = sbr.rel (%p156) target = $region20
      $region19: #{tpu_custom_call.1} parent=5 // pred_region
        // Predicated region
        $region21: #{tpu_custom_call.1} parent=19 // pred_check
          %p159 = pneg %p67
        $region22: #{tpu_custom_call.1} parent=19 // pred_check_branch
          %161 = sbr.rel (%p159) target = $region24
        $region23: #{tpu_custom_call.1} parent=19 // pred_region
          %s162 = sand.u32 %s57, 1
          %s163 = scalar_lea.sflag [#allocation3], %s162
          %s164 = sand.u32 %s57, 1
          %s165 = smul.addr %s164, 64
          %s166 = scalar_lea.vmem [#allocation2], %s165
          %s167 = smul.u32 2, %s24
          %169 = vsyncadd %s163, 0
          %s170 = sadd.s32 %s25, %s167
          %s171 = smul.addr %s23, 2
          %s172 = sadd.s32 %s170, %s171
          %s173 = smul.addr %s22, 8
          %s174 = sadd.s32 %s172, %s173
          %s175 = smul.addr %s174, 8
          %s176 = scalar_lea.hbm %s0, %s175
          %s177 = sshll.u32 %s176, 4
          %s178 = int_to_ptr.hbm [resolvable:$true] %s177
          %s179 = sshll.u32 %s166, 4
          %s180 = int_to_ptr.vmem [resolvable:$true] %s179
          %185 = dma.hbm_to_vmem [thread:$0]  %s178, 1024, %s180, %s163, 128, 128, 8
        $region24: #{tpu_custom_call.1} parent=19 // pred_fallthru
          _
      $region20: #{tpu_custom_call.1} parent=5 // pred_fallthru
        _
      %p186 = scmp.le.s32.totalorder 1, %s15
      %p187 = scmp.lt.s32.totalorder %s15, 3
      %p188 = pnand %p186, %p187
      %p189 = pneg %p188
      // Predicated region
      $region25: #{tpu_custom_call.1} parent=5 // pred_check
        _
      $region26: #{tpu_custom_call.1} parent=5 // pred_check_branch
        %191 = sbr.rel (%p188) target = $region28
      $region27: #{tpu_custom_call.1} parent=5 // pred_region
        %s192 = ssub.s32 %s15, 1
        %s193 = sand.u32 %s60, 1
        %s194 = scalar_lea.sflag [#allocation3], %s193
        %s195 = sand.u32 %s60, 1
        %s196 = smul.addr %s195, 64
        %s197 = scalar_lea.vmem [#allocation2], %s196
        // Predicated region
        $region29: #{tpu_custom_call.1} parent=27 // pred_check
          %p198 = pneg %p73
        $region30: #{tpu_custom_call.1} parent=27 // pred_check_branch
          %200 = sbr.rel (%p198) target = $region32
        $region31: #{tpu_custom_call.1} parent=27 // pred_region
          %202 = dma.done %s194, 1024
        $region32: #{tpu_custom_call.1} parent=27 // pred_fallthru
          _
        // Predicated region
        $region33: #{tpu_custom_call.1} parent=27 // pred_check
          %p203 = pneg %p94
        $region34: #{tpu_custom_call.1} parent=27 // pred_check_branch
          %205 = sbr.rel (%p203) target = $region36
        $region35: #{tpu_custom_call.1} parent=27 // pred_region
          %207 = dma.done [#allocation6], 256
        $region36: #{tpu_custom_call.1} parent=27 // pred_fallthru
          _
        %s208 = sand.u32 %s60, 1
        %s209 = scalar_lea.sflag [#allocation3], %s208
        %s210 = sand.u32 %s60, 1
        %s211 = smul.addr %s210, 64
        %s212 = scalar_lea.vmem [#allocation2], %s211
        %p213 = pneg %p73
        %p214 = pneg %p70
        %p215 = pneg %p94
        %p216 = pneg %p91
        %p217 = pneg %p126
        %p218 = pneg %p123
        %s219 = sand.u32 %s113, 1
        %s220 = scalar_lea.sflag [#allocation4], %s219
        %s221 = sand.u32 %s113, 1
        %s222 = smul.addr %s221, 32
        %s223 = scalar_lea.vmem [#allocation7], %s222
        %s224 = smul.u32 2, %s28
        %s225 = smul.u32 16, %s28
        %v227 = vld [vmem:[%s197] sm:$0xff]
        %v228 = vld [vmem:[%s197 + $0x8] sm:$0xff]
        %s229 = scalar_lea.vmem %s197, 16 [#allocation2]
        %v230 = vld [vmem:[%s229] sm:$0xff]
        %v231 = vld [vmem:[%s229 + $0x8] sm:$0xff]
        %234 = vrot.lane.b32.xlu0 %v230, 16
        %v235 = vpop.permute.xlu0 %234
        %236 = vrot.lane.b32.xlu0 %v231, 16
        %v237 = vpop.permute.xlu0 %236
        %vm240 = vcmask 130048
        %v241 = vsel %vm240, %v227, %v235
        %v242 = vsel %vm240, %v228, %v237
        %s243 = scalar_lea.vmem %s197, 32 [#allocation2]
        %v244 = vld [vmem:[%s243] sm:$0xff]
        %v245 = vld [vmem:[%s243 + $0x8] sm:$0xff]
        %s246 = scalar_lea.vmem %s197, 48 [#allocation2]
        %v247 = vld [vmem:[%s246] sm:$0xff]
        %v248 = vld [vmem:[%s246 + $0x8] sm:$0xff]
        %251 = vrot.lane.b32.xlu0 %v247, 16
        %v252 = vpop.permute.xlu0 %251
        %253 = vrot.lane.b32.xlu0 %v248, 16
        %v254 = vpop.permute.xlu0 %253
        %v257 = vsel %vm240, %v244, %v252
        %v258 = vsel %vm240, %v245, %v254
        %v259 = vld [vmem:[#allocation5] sm:$0xf]
        %v260 = vld [vmem:[#allocation5 + $0x4] sm:$0xf]
        %v261 = vld [vmem:[#allocation5 + $0x8] sm:$0xf]
        %v262 = vld [vmem:[#allocation5 + $0xc] sm:$0xf]
        %v263 = vpack.c.bf16 %v241, %v241
        %v264 = vpack.c.bf16 %v242, %v242
        %v265 = vpack.c.bf16 %v257, %v257
        %v266 = vpack.c.bf16 %v258, %v258
        %v267 = vunpack.c.l.bf16 %v263
        %v268 = vunpack.c.l.bf16 %v264
        %v269 = vunpack.c.l.bf16 %v265
        %v270 = vunpack.c.l.bf16 %v266
        %v271 = vsub.f32 %v241, %v267
        %v272 = vsub.f32 %v242, %v268
        %v273 = vsub.f32 %v257, %v269
        %v274 = vsub.f32 %v258, %v270
        %v275 = vpack.c.bf16 %v271, %v271
        %v276 = vpack.c.bf16 %v272, %v272
        %v277 = vpack.c.bf16 %v273, %v273
        %v278 = vpack.c.bf16 %v274, %v274
        %v283 = vunpack.c.l.b16 %v275
        %v284 = vunpack.c.l.b16 %v276
        %v285 = vunpack.c.l.b16 %v277
        %v286 = vunpack.c.l.b16 %v278
        %v287 = vpack.c.b16 %v284, %v283
        %v288 = vpack.c.b16 %v286, %v285
        %v293 = vunpack.c.l.b16 %v259
        %v294 = vunpack.c.l.b16 %v260
        %v295 = vunpack.c.l.b16 %v261
        %v296 = vunpack.c.l.b16 %v262
        %v297 = vpack.c.b16 %v294, %v293
        %v298 = vpack.c.b16 %v296, %v295
        %vm301 = vcmask 261120
        %v303 = vsel %vm301, %v287, 0
        %v306 = vsel %vm301, %v288, 0
        %308 = vmatpush.bf16.msra.mxu0 0
        %309 = vmatpush.bf16.msra.mxu0 0
        %310 = vmatpush.bf16.msra.mxu0 0
        %311 = vmatpush.bf16.msra.mxu0 0
        %312 = vmatpush.bf16.msra.mxu0 0
        %313 = vmatpush.bf16.msra.mxu0 0
        %314 = vmatpush.bf16.msra.mxu0 %v298
        %315 = vmatpush.bf16.msra.mxu0 %v297
        %316 = vmatmul.bf16.gmra.mxu0 %v303
        %v317 = vpop.f32.mrf.mxu0
        %v318 = vadd.f32 0.0, %v317
        %v319 = vpop.f32.mrf.mxu0
        %v320 = vadd.f32 0.0, %v319
        %321 = vmatmul.bf16.gmra.mxu0 %v306
        %v322 = vpop.f32.mrf.mxu0
        %v323 = vadd.f32 0.0, %v322
        %v324 = vpop.f32.mrf.mxu0
        %v325 = vadd.f32 0.0, %v324
        %326 = vdwg.mxu0
        %v331 = vunpack.c.l.b16 %v263
        %v332 = vunpack.c.l.b16 %v264
        %v333 = vunpack.c.l.b16 %v265
        %v334 = vunpack.c.l.b16 %v266
        %v335 = vpack.c.b16 %v332, %v331
        %v336 = vpack.c.b16 %v334, %v333
        %v338 = vsel %vm301, %v335, 0
        %v341 = vsel %vm301, %v336, 0
        %343 = vmatpush.bf16.msra.mxu0 0
        %344 = vmatpush.bf16.msra.mxu0 0
        %345 = vmatpush.bf16.msra.mxu0 0
        %346 = vmatpush.bf16.msra.mxu0 0
        %347 = vmatpush.bf16.msra.mxu0 0
        %348 = vmatpush.bf16.msra.mxu0 0
        %349 = vmatpush.bf16.msra.mxu0 %v298
        %350 = vmatpush.bf16.msra.mxu0 %v297
        %351 = vmatmul.bf16.gmra.mxu0 %v338
        %v352 = vpop.f32.mrf.mxu0
        %v353 = vadd.f32 %v318, %v352
        %v354 = vpop.f32.mrf.mxu0
        %v355 = vadd.f32 %v320, %v354
        %356 = vmatmul.bf16.gmra.mxu0 %v341
        %v357 = vpop.f32.mrf.mxu0
        %v358 = vadd.f32 %v323, %v357
        %v359 = vpop.f32.mrf.mxu0
        %v360 = vadd.f32 %v325, %v359
        %361 = vdwg.mxu0
        %v362 = vunpack.c.l.bf16 %v275
        %v363 = vunpack.c.l.bf16 %v276
        %v364 = vunpack.c.l.bf16 %v277
        %v365 = vunpack.c.l.bf16 %v278
        %v366 = vsub.f32 %v271, %v362
        %v367 = vsub.f32 %v272, %v363
        %v368 = vsub.f32 %v273, %v364
        %v369 = vsub.f32 %v274, %v365
        %v370 = vpack.c.bf16 %v367, %v366
        %v371 = vpack.c.bf16 %v369, %v368
        %v373 = vsel %vm301, %v370, 0
        %v376 = vsel %vm301, %v371, 0
        %378 = vmatpush.bf16.msra.mxu0 0
        %379 = vmatpush.bf16.msra.mxu0 0
        %380 = vmatpush.bf16.msra.mxu0 0
        %381 = vmatpush.bf16.msra.mxu0 0
        %382 = vmatpush.bf16.msra.mxu0 0
        %383 = vmatpush.bf16.msra.mxu0 0
        %384 = vmatpush.bf16.msra.mxu0 %v298
        %385 = vmatpush.bf16.msra.mxu0 %v297
        %386 = vmatmul.bf16.gmra.mxu0 %v373
        %v387 = vpop.f32.mrf.mxu0
        %v388 = vadd.f32 0.0, %v387
        %v389 = vpop.f32.mrf.mxu0
        %v390 = vadd.f32 0.0, %v389
        %391 = vmatmul.bf16.gmra.mxu0 %v376
        %v392 = vpop.f32.mrf.mxu0
        %v393 = vadd.f32 0.0, %v392
        %v394 = vpop.f32.mrf.mxu0
        %v395 = vadd.f32 0.0, %v394
        %396 = vdwg.mxu0
        %v397 = vadd.f32 %v353, %v388
        %v398 = vadd.f32 %v355, %v390
        %v399 = vadd.f32 %v358, %v393
        %v400 = vadd.f32 %v360, %v395
        %v403 = vrot.slane %v397, 1
        %v404 = vrot.slane %v397, 2
        %v405 = vrot.slane %v397, 3
        %v406 = vrot.slane %v397, 4
        %v407 = vrot.slane %v397, 5
        %v408 = vrot.slane %v397, 6
        %v409 = vrot.slane %v397, 7
        %v410 = vrot.slane %v398, 1
        %v411 = vrot.slane %v398, 2
        %v412 = vrot.slane %v398, 3
        %v413 = vrot.slane %v398, 4
        %v414 = vrot.slane %v398, 5
        %v415 = vrot.slane %v398, 6
        %v416 = vrot.slane %v398, 7
        %vm431 = vcmask 253952
        %432 = vst.msk [vmem:[%s223] sm:$0x1] %vm431, %v397
        %433 = vst.msk [vmem:[%s223 + $0x2] sm:$0x1] %vm431, %v403
        %434 = vst.msk [vmem:[%s223 + $0x4] sm:$0x1] %vm431, %v404
        %435 = vst.msk [vmem:[%s223 + $0x6] sm:$0x1] %vm431, %v405
        %436 = vst.msk [vmem:[%s223 + $0x8] sm:$0x1] %vm431, %v406
        %437 = vst.msk [vmem:[%s223 + $0xa] sm:$0x1] %vm431, %v407
        %438 = vst.msk [vmem:[%s223 + $0xc] sm:$0x1] %vm431, %v408
        %439 = vst.msk [vmem:[%s223 + $0xe] sm:$0x1] %vm431, %v409
        %440 = vst.msk [vmem:[%s223 + $0x10] sm:$0x1] %vm431, %v398
        %441 = vst.msk [vmem:[%s223 + $0x12] sm:$0x1] %vm431, %v410
        %442 = vst.msk [vmem:[%s223 + $0x14] sm:$0x1] %vm431, %v411
        %443 = vst.msk [vmem:[%s223 + $0x16] sm:$0x1] %vm431, %v412
        %444 = vst.msk [vmem:[%s223 + $0x18] sm:$0x1] %vm431, %v413
        %445 = vst.msk [vmem:[%s223 + $0x1a] sm:$0x1] %vm431, %v414
        %446 = vst.msk [vmem:[%s223 + $0x1c] sm:$0x1] %vm431, %v415
        %447 = vst.msk [vmem:[%s223 + $0x1e] sm:$0x1] %vm431, %v416
        %v450 = vrot.slane %v399, 1
        %v451 = vrot.slane %v399, 2
        %v452 = vrot.slane %v399, 3
        %v453 = vrot.slane %v399, 4
        %v454 = vrot.slane %v399, 5
        %v455 = vrot.slane %v399, 6
        %v456 = vrot.slane %v399, 7
        %v457 = vrot.slane %v400, 1
        %v458 = vrot.slane %v400, 2
        %v459 = vrot.slane %v400, 3
        %v460 = vrot.slane %v400, 4
        %v461 = vrot.slane %v400, 5
        %v462 = vrot.slane %v400, 6
        %v463 = vrot.slane %v400, 7
        %478 = vst.msk [vmem:[%s223 + $0x1] sm:$0x1] %vm431, %v399
        %479 = vst.msk [vmem:[%s223 + $0x3] sm:$0x1] %vm431, %v450
        %480 = vst.msk [vmem:[%s223 + $0x5] sm:$0x1] %vm431, %v451
        %481 = vst.msk [vmem:[%s223 + $0x7] sm:$0x1] %vm431, %v452
        %482 = vst.msk [vmem:[%s223 + $0x9] sm:$0x1] %vm431, %v453
        %483 = vst.msk [vmem:[%s223 + $0xb] sm:$0x1] %vm431, %v454
        %484 = vst.msk [vmem:[%s223 + $0xd] sm:$0x1] %vm431, %v455
        %485 = vst.msk [vmem:[%s223 + $0xf] sm:$0x1] %vm431, %v456
        %486 = vst.msk [vmem:[%s223 + $0x11] sm:$0x1] %vm431, %v400
        %487 = vst.msk [vmem:[%s223 + $0x13] sm:$0x1] %vm431, %v457
        %488 = vst.msk [vmem:[%s223 + $0x15] sm:$0x1] %vm431, %v458
        %489 = vst.msk [vmem:[%s223 + $0x17] sm:$0x1] %vm431, %v459
        %490 = vst.msk [vmem:[%s223 + $0x19] sm:$0x1] %vm431, %v460
        %491 = vst.msk [vmem:[%s223 + $0x1b] sm:$0x1] %vm431, %v461
        %492 = vst.msk [vmem:[%s223 + $0x1d] sm:$0x1] %vm431, %v462
        %493 = vst.msk [vmem:[%s223 + $0x1f] sm:$0x1] %vm431, %v463
        %s494 = sand.u32 %s113, 1
        %s495 = scalar_lea.sflag [#allocation4], %s494
        %s496 = sand.u32 %s113, 1
        %s497 = smul.addr %s496, 32
        %s498 = scalar_lea.vmem [#allocation7], %s497
        // Predicated region
        $region37: #{tpu_custom_call.1} parent=27 // pred_check
          %p499 = pneg %p123
        $region38: #{tpu_custom_call.1} parent=27 // pred_check_branch
          %501 = sbr.rel (%p499) target = $region40
        $region39: #{tpu_custom_call.1} parent=27 // pred_region
          %s502 = smul.u32 16, %s28
          %504 = vsyncadd %s495, 0
          %s505 = sadd.s32 %s29, %s502
          %s506 = smul.addr %s27, 16
          %s507 = sadd.s32 %s505, %s506
          %s508 = smul.addr %s26, 16
          %s509 = sadd.s32 %s507, %s508
          %s510 = smul.addr %s509, 2
          %s511 = scalar_lea.hbm %s2, %s510
          %s512 = sshll.u32 %s498, 4
          %s513 = int_to_ptr.vmem [resolvable:$true] %s512
          %s514 = sshll.u32 %s511, 4
          %s515 = int_to_ptr.hbm [resolvable:$true] %s514
          %520 = dma.vmem_to_hbm [thread:$0]  %s513, 512, %s515, %s495, 32, 32, 2
        $region40: #{tpu_custom_call.1} parent=27 // pred_fallthru
          _
      $region28: #{tpu_custom_call.1} parent=5 // pred_fallthru
        _
      %p521 = scmp.le.s32.totalorder 2, %s15
      // Predicated region
      $region41: #{tpu_custom_call.1} parent=5 // pred_check
        %p522 = pneg %p521
      $region42: #{tpu_custom_call.1} parent=5 // pred_check_branch
        %524 = sbr.rel (%p522) target = $region44
      $region43: #{tpu_custom_call.1} parent=5 // pred_region
        %s525 = ssub.s32 %s15, 2
        // Predicated region
        $region45: #{tpu_custom_call.1} parent=43 // pred_check
          %p526 = pneg %p129
        $region46: #{tpu_custom_call.1} parent=43 // pred_check_branch
          %528 = sbr.rel (%p526) target = $region48
        $region47: #{tpu_custom_call.1} parent=43 // pred_region
          %s529 = sand.u32 %s114, 1
          %s530 = scalar_lea.sflag [#allocation4], %s529
          %s531 = sand.u32 %s114, 1
          %s532 = smul.addr %s531, 32
          %s533 = scalar_lea.vmem [#allocation7], %s532
          %535 = dma.done %s530, 512
        $region48: #{tpu_custom_call.1} parent=43 // pred_fallthru
          _
      $region44: #{tpu_custom_call.1} parent=5 // pred_fallthru
        _
    $region6: #{tpu_custom_call.1} parent=1 // loop_footer
      %s19 = sadd.s32 1, %s15
    $region7: #{tpu_custom_call.1} parent=1 // loop_footer_branch
      %14 = sbr.rel target = $region3
    $region8: #{tpu_custom_call.1} parent=1 // loop_exit
      _
    %536 = vsyncpa [#allocation3], 1
    %s537 = scalar_lea.sflag [#allocation3], 1
    %538 = vsyncpa %s537, 1
    %539 = vsyncpa [#allocation6], 1
    %540 = vsyncpa [#allocation4], 1
    %s541 = scalar_lea.sflag [#allocation4], 1
    %542 = vsyncpa %s541, 1

</llo_original>
